<compile_context>
chip_gen: v6e
topology: v6e:2x2x1
jax: 0.10.0
libtpu: 0.0.40
codegen_flags: <defaults>
</compile_context>

<pallas_src>
import functools

import jax
import jax.numpy as jnp
import numpy as np
from jax.experimental import pallas as pl
from jax.experimental.pallas import tpu as pltpu

_LANE = 128


def _round_up(x, m):
    return ((x + m - 1) // m) * m


def actor_kernel(x_ref, w1_ref, b1_ref, w2_ref, b2_ref, w3_ref, b3_ref, o_ref):
    # fc1 + relu  (bf16 operands, f32 accumulate, f32 elementwise)
    h1 = jnp.dot(x_ref[...], w1_ref[...], preferred_element_type=jnp.float32)
    h1 = jnp.maximum(h1 + b1_ref[...], 0.0)
    # fc2 + relu
    h2 = jnp.dot(h1.astype(jnp.bfloat16), w2_ref[...],
                 preferred_element_type=jnp.float32)
    h2 = jnp.maximum(h2 + b2_ref[...], 0.0)
    # u1 + tanh
    y = jnp.dot(h2.astype(jnp.bfloat16), w3_ref[...],
                preferred_element_type=jnp.float32)
    o_ref[...] = jnp.tanh(y + b3_ref[...]).astype(o_ref.dtype)


@functools.partial(jax.jit, static_argnames=("tile_b",))
def actor_forward(state, params, *, tile_b=512):
    """state: (B, state_dim) f32; params: dict w1,b1,w2,b2,w3,b3 (f32)."""
    w1, b1, w2, b2, w3, b3 = (params[k] for k in ("w1", "b1", "w2", "b2", "w3", "b3"))
    B, state_dim = state.shape
    fc1 = w1.shape[1]
    fc2 = w2.shape[1]
    n_actions = w3.shape[1]

    # ---- lane-dense output: pad n_actions up to a multiple of 128 ----------
    n_pad = _round_up(max(n_actions, _LANE), _LANE)
    w3p = jnp.zeros((fc2, n_pad), w3.dtype).at[:, :n_actions].set(w3)
    b3p = jnp.zeros((1, n_pad), b3.dtype).at[:, :n_actions].set(b3)

    # ---- batch tiling -------------------------------------------------------
    tb = _round_up(max(8, min(tile_b, _round_up(B, 8))), 8)
    b_pad = _round_up(B, tb)

    # bf16 matmul operands (halves HBM bytes for the streamed state too).
    x = state.astype(jnp.bfloat16)
    if b_pad != B:
        x = jnp.pad(x, ((0, b_pad - B), (0, 0)))
    w1b = w1.astype(jnp.bfloat16)
    w2b = w2.astype(jnp.bfloat16)
    w3b = w3p.astype(jnp.bfloat16)

    grid = (b_pad // tb,)
    resident = lambda i: (0, 0)  # weights/biases pinned across grid steps

    out = pl.pallas_call(
        actor_kernel,
        out_shape=jax.ShapeDtypeStruct((b_pad, n_pad), jnp.float32),
        grid_spec=pltpu.PrefetchScalarGridSpec(
            num_scalar_prefetch=0,
            grid=grid,
            in_specs=[
                pl.BlockSpec((tb, state_dim), lambda i: (i, 0)),   # state stream
                pl.BlockSpec((state_dim, fc1), resident),          # w1
                pl.BlockSpec((1, fc1), resident),                  # b1
                pl.BlockSpec((fc1, fc2), resident),                # w2
                pl.BlockSpec((1, fc2), resident),                  # b2
                pl.BlockSpec((fc2, n_pad), resident),              # w3 (padded)
                pl.BlockSpec((1, n_pad), resident),                # b3 (padded)
            ],
            out_specs=pl.BlockSpec((tb, n_pad), lambda i: (i, 0)),
        ),
        compiler_params=pltpu.CompilerParams(
            dimension_semantics=("parallel",),  # v7x: 2 TCs share the batch axis
        ),
    )(x, w1b, b1, w2b, b2, w3b, b3p)

    return out[:B, :n_actions]


def init_params(key, state_dim, fc1_dims, fc2_dims, n_actions):
    """Deterministic init mimicking PyTorch nn.Linear default U(-1/sqrt(fan_in), +)."""
    ks = jax.random.split(key, 6)

    def lin(kw, kb, fan_in, fan_out):
        bound = 1.0 / np.sqrt(fan_in)
        w = jax.random.uniform(kw, (fan_in, fan_out), jnp.float32, -bound, bound)
        b = jax.random.uniform(kb, (1, fan_out), jnp.float32, -bound, bound)
        return w, b

    w1, b1 = lin(ks[0], ks[1], state_dim, fc1_dims)
    w2, b2 = lin(ks[2], ks[3], fc1_dims, fc2_dims)
    w3, b3 = lin(ks[4], ks[5], fc2_dims, n_actions)
    return dict(w1=w1, b1=b1, w2=w2, b2=b2, w3=w3, b3=b3)


def _reference(state, params):
    h1 = jnp.maximum(state @ params["w1"] + params["b1"], 0.0)
    h2 = jnp.maximum(h1 @ params["w2"] + params["b2"], 0.0)
    return jnp.tanh(h2 @ params["w3"] + params["b3"])


if __name__ == "__main__":
    # Small shapes consistent with ActorNetwork(state_dim=[16], fc1=32, fc2=32, n_actions=8)
    STATE_DIM, FC1, FC2, N_ACTIONS = 16, 32, 32, 8

    key = jax.random.PRNGKey(0)
    k_params, k_s1, k_s2 = jax.random.split(key, 3)
    params = init_params(k_params, STATE_DIM, FC1, FC2, N_ACTIONS)

    # Case 1: tiny batch (single grid step).
    state_small = jax.random.normal(k_s1, (8, STATE_DIM), dtype=jnp.float32)
    out_small = jax.block_until_ready(actor_forward(state_small, params))
    ref_small = _reference(state_small, params)
    np.testing.assert_allclose(np.asarray(out_small), np.asarray(ref_small),
                               rtol=2e-2, atol=2e-2)
    assert out_small.shape == (8, N_ACTIONS)

    # Case 2: batch that exercises the grid + padding path (tile_b=64 -> 4 steps).
    state_big = jax.random.normal(k_s2, (200, STATE_DIM), dtype=jnp.float32)
    out_big = jax.block_until_ready(actor_forward(state_big, params, tile_b=64))
    ref_big = _reference(state_big, params)
    np.testing.assert_allclose(np.asarray(out_big), np.asarray(ref_big),
                               rtol=2e-2, atol=2e-2)
    assert out_big.shape == (200, N_ACTIONS)

    print("KERNEL_OK")
</pallas_src>

<mosaic_0001>
module attributes {stable_mosaic.version = 11 : i64} {
  func.func @actor_kernel(%arg0: i32, %arg1: memref<8x16xbf16, #tpu.memory_space<vmem>>, %arg2: memref<16x32xbf16, #tpu.memory_space<vmem>>, %arg3: memref<1x32xf32, #tpu.memory_space<vmem>>, %arg4: memref<32x32xbf16, #tpu.memory_space<vmem>>, %arg5: memref<1x32xf32, #tpu.memory_space<vmem>>, %arg6: memref<32x128xbf16, #tpu.memory_space<vmem>>, %arg7: memref<1x128xf32, #tpu.memory_space<vmem>>, %arg8: memref<8x128xf32, #tpu.memory_space<vmem>>) attributes {dimension_semantics = [#tpu.dimension_semantics<parallel>], iteration_bounds = array<i64: 1>, scalar_prefetch = 0 : i64, scratch_operands = 0 : i64, tpu.core_type = #tpu.core_type<tc>, window_params = [{transform_indices = @transform_0, window_bounds = array<i64: 8, 16>}, {pipeline_mode = #tpu.pipeline_mode<synchronous>, transform_indices = @transform_1, window_bounds = array<i64: 16, 32>}, {pipeline_mode = #tpu.pipeline_mode<synchronous>, transform_indices = @transform_2, window_bounds = array<i64: 1, 32>}, {pipeline_mode = #tpu.pipeline_mode<synchronous>, transform_indices = @transform_3, window_bounds = array<i64: 32, 32>}, {pipeline_mode = #tpu.pipeline_mode<synchronous>, transform_indices = @transform_4, window_bounds = array<i64: 1, 32>}, {pipeline_mode = #tpu.pipeline_mode<synchronous>, transform_indices = @transform_5, window_bounds = array<i64: 32, 128>}, {pipeline_mode = #tpu.pipeline_mode<synchronous>, transform_indices = @transform_6, window_bounds = array<i64: 1, 128>}, {transform_indices = @transform_7, window_bounds = array<i64: 8, 128>}]} {
    %c0 = arith.constant 0 : index
    %c0_0 = arith.constant 0 : index
    %0 = vector.load %arg1[%c0, %c0_0] : memref<8x16xbf16, #tpu.memory_space<vmem>>, vector<8x16xbf16>
    %c0_1 = arith.constant 0 : index
    %c0_2 = arith.constant 0 : index
    %1 = vector.load %arg2[%c0_1, %c0_2] : memref<16x32xbf16, #tpu.memory_space<vmem>>, vector<16x32xbf16>
    %cst = arith.constant dense<0.000000e+00> : vector<8x32xf32>
    %2 = tpu.matmul %0, %1, %cst {dimension_numbers = #tpu.dot_dimension_numbers<[1], [0], [0], [1], [0, 0, 1, 1], [], []>} : vector<8x16xbf16>, vector<16x32xbf16>, vector<8x32xf32> -> vector<8x32xf32>
    %c0_3 = arith.constant 0 : index
    %c0_4 = arith.constant 0 : index
    %3 = vector.load %arg3[%c0_3, %c0_4] : memref<1x32xf32, #tpu.memory_space<vmem>>, vector<1x32xf32>
    %4 = vector.broadcast %3 : vector<1x32xf32> to vector<8x32xf32>
    %5 = arith.addf %2, %4 : vector<8x32xf32>
    %cst_5 = arith.constant 0.000000e+00 : f32
    %6 = vector.broadcast %cst_5 : f32 to vector<8x32xf32>
    %7 = arith.maximumf %5, %6 : vector<8x32xf32>
    %8 = arith.truncf %7 : vector<8x32xf32> to vector<8x32xbf16>
    %c0_6 = arith.constant 0 : index
    %c0_7 = arith.constant 0 : index
    %9 = vector.load %arg4[%c0_6, %c0_7] : memref<32x32xbf16, #tpu.memory_space<vmem>>, vector<32x32xbf16>
    %cst_8 = arith.constant dense<0.000000e+00> : vector<8x32xf32>
    %10 = tpu.matmul %8, %9, %cst_8 {dimension_numbers = #tpu.dot_dimension_numbers<[1], [0], [0], [1], [0, 0, 1, 1], [], []>} : vector<8x32xbf16>, vector<32x32xbf16>, vector<8x32xf32> -> vector<8x32xf32>
    %c0_9 = arith.constant 0 : index
    %c0_10 = arith.constant 0 : index
    %11 = vector.load %arg5[%c0_9, %c0_10] : memref<1x32xf32, #tpu.memory_space<vmem>>, vector<1x32xf32>
    %12 = vector.broadcast %11 : vector<1x32xf32> to vector<8x32xf32>
    %13 = arith.addf %10, %12 : vector<8x32xf32>
    %cst_11 = arith.constant 0.000000e+00 : f32
    %14 = vector.broadcast %cst_11 : f32 to vector<8x32xf32>
    %15 = arith.maximumf %13, %14 : vector<8x32xf32>
    %16 = arith.truncf %15 : vector<8x32xf32> to vector<8x32xbf16>
    %c0_12 = arith.constant 0 : index
    %c0_13 = arith.constant 0 : index
    %17 = vector.load %arg6[%c0_12, %c0_13] : memref<32x128xbf16, #tpu.memory_space<vmem>>, vector<32x128xbf16>
    %cst_14 = arith.constant dense<0.000000e+00> : vector<8x128xf32>
    %18 = tpu.matmul %16, %17, %cst_14 {dimension_numbers = #tpu.dot_dimension_numbers<[1], [0], [0], [1], [0, 0, 1, 1], [], []>} : vector<8x32xbf16>, vector<32x128xbf16>, vector<8x128xf32> -> vector<8x128xf32>
    %c0_15 = arith.constant 0 : index
    %c0_16 = arith.constant 0 : index
    %19 = vector.load %arg7[%c0_15, %c0_16] : memref<1x128xf32, #tpu.memory_space<vmem>>, vector<1x128xf32>
    %20 = vector.broadcast %19 : vector<1x128xf32> to vector<8x128xf32>
    %21 = arith.addf %18, %20 : vector<8x128xf32>
    %22 = math.tanh %21 : vector<8x128xf32>
    %c0_17 = arith.constant 0 : index
    %c0_18 = arith.constant 0 : index
    %23 = vector.load %arg8[%c0_17, %c0_18] : memref<8x128xf32, #tpu.memory_space<vmem>>, vector<8x128xf32>
    tpu.vector_store %arg8[%c0_17, %c0_18], %22 {strides = array<i32>} : memref<8x128xf32, #tpu.memory_space<vmem>>, vector<8x128xf32>,
    return
  }
  func.func @transform_0(%arg0: i32) -> (i32, i32) {
    %c0_i32 = arith.constant 0 : i32
    %c0_i32_0 = arith.constant 0 : i32
    return %arg0, %c0_i32 : i32, i32
  }
  func.func @transform_1(%arg0: i32) -> (i32, i32) {
    %c0_i32 = arith.constant 0 : i32
    %c0_i32_0 = arith.constant 0 : i32
    %c0_i32_1 = arith.constant 0 : i32
    return %c0_i32, %c0_i32_0 : i32, i32
  }
  func.func @transform_2(%arg0: i32) -> (i32, i32) {
    %c0_i32 = arith.constant 0 : i32
    %c0_i32_0 = arith.constant 0 : i32
    %c0_i32_1 = arith.constant 0 : i32
    return %c0_i32, %c0_i32_0 : i32, i32
  }
  func.func @transform_3(%arg0: i32) -> (i32, i32) {
    %c0_i32 = arith.constant 0 : i32
    %c0_i32_0 = arith.constant 0 : i32
    %c0_i32_1 = arith.constant 0 : i32
    return %c0_i32, %c0_i32_0 : i32, i32
  }
  func.func @transform_4(%arg0: i32) -> (i32, i32) {
    %c0_i32 = arith.constant 0 : i32
    %c0_i32_0 = arith.constant 0 : i32
    %c0_i32_1 = arith.constant 0 : i32
    return %c0_i32, %c0_i32_0 : i32, i32
  }
  func.func @transform_5(%arg0: i32) -> (i32, i32) {
    %c0_i32 = arith.constant 0 : i32
    %c0_i32_0 = arith.constant 0 : i32
    %c0_i32_1 = arith.constant 0 : i32
    return %c0_i32, %c0_i32_0 : i32, i32
  }
  func.func @transform_6(%arg0: i32) -> (i32, i32) {
    %c0_i32 = arith.constant 0 : i32
    %c0_i32_0 = arith.constant 0 : i32
    %c0_i32_1 = arith.constant 0 : i32
    return %c0_i32, %c0_i32_0 : i32, i32
  }
  func.func @transform_7(%arg0: i32) -> (i32, i32) {
    %c0_i32 = arith.constant 0 : i32
    %c0_i32_0 = arith.constant 0 : i32
    return %arg0, %c0_i32 : i32, i32
  }
}

</mosaic_0001>

<llo_original>
// kernel: actor_forward.1
$region0: #{actor_forward.1}
  #allocation0 [shape = 'u32[]', space=smem, size = 0x4, offset = 0x4, fixed_abs, tag = 'smem constant byte address 0x4 - core index']
  #allocation1 [shape = 'u32[144,128]{1,0:T(1,128)}', space=vmem, size = 0x12000, scoped, tag = 'internal scratch']
  %s0 = inlined_call_operand.vmem [shape: bf16[8,16], index: 0, kind: input, shape index: {}]
  %s1 = inlined_call_operand.vmem [shape: bf16[16,32], index: 1, kind: input, shape index: {}]
  %s2 = inlined_call_operand.vmem [shape: f32[1,32], index: 2, kind: input, shape index: {}]
  %s3 = inlined_call_operand.vmem [shape: bf16[32,32], index: 3, kind: input, shape index: {}]
  %s4 = inlined_call_operand.vmem [shape: f32[1,32], index: 4, kind: input, shape index: {}]
  %s5 = inlined_call_operand.vmem [shape: bf16[32,128], index: 5, kind: input, shape index: {}]
  %s6 = inlined_call_operand.vmem [shape: f32[1,128], index: 6, kind: input, shape index: {}]
  %s7 = inlined_call_operand.hbm [shape: f32[8,128], index: 7, kind: output, shape index: {}]
  %s8 = sld [smem:[#allocation0]]
  $region38: #{actor_forward.1} parent=0
    _
  %s10 = ssub.s32 1, %s8
  %s11 = scalar_select 0, %s10, %s8
  $region1: #{actor_forward.1} parent=0
    #allocation2 [shape = 'u8[4096]{0}', space=vmem, size = 0x1000, scoped, tag = 'output window, operand 0, single buffered']
    #allocation3 [shape = 's32[1]{0}', space=sflag, size = 0x4, scoped, tag = 'scoped memory for actor_forward.1']
    %12 = vsyncpa [#allocation3], 0
    // Predicated region
    $region2: #{actor_forward.1} parent=1 // pred_check
      _
    $region3: #{actor_forward.1} parent=1 // pred_check_branch
      %14 = sbr.rel (0) target = $region5
    $region4: #{actor_forward.1} parent=1 // pred_region
      _
    $region5: #{actor_forward.1} parent=1 // pred_fallthru
      _
    // Predicated region
    $region6: #{actor_forward.1} parent=1 // pred_check
      _
    $region7: #{actor_forward.1} parent=1 // pred_check_branch
      %16 = sbr.rel (0) target = $region9
    $region8: #{actor_forward.1} parent=1 // pred_region
      _
    $region9: #{actor_forward.1} parent=1 // pred_fallthru
      _
    // Predicated region
    $region10: #{actor_forward.1} parent=1 // pred_check
      _
    $region11: #{actor_forward.1} parent=1 // pred_check_branch
      %18 = sbr.rel (0) target = $region13
    $region12: #{actor_forward.1} parent=1 // pred_region
      _
    $region13: #{actor_forward.1} parent=1 // pred_fallthru
      _
    // Predicated region
    $region14: #{actor_forward.1} parent=1 // pred_check
      _
    $region15: #{actor_forward.1} parent=1 // pred_check_branch
      %20 = sbr.rel (0) target = $region17
    $region16: #{actor_forward.1} parent=1 // pred_region
      _
    $region17: #{actor_forward.1} parent=1 // pred_fallthru
      _
    // Predicated region
    $region18: #{actor_forward.1} parent=1 // pred_check
      _
    $region19: #{actor_forward.1} parent=1 // pred_check_branch
      %22 = sbr.rel (0) target = $region21
    $region20: #{actor_forward.1} parent=1 // pred_region
      _
    $region21: #{actor_forward.1} parent=1 // pred_fallthru
      _
    // Predicated region
    $region22: #{actor_forward.1} parent=1 // pred_check
      _
    $region23: #{actor_forward.1} parent=1 // pred_check_branch
      %24 = sbr.rel (0) target = $region25
    $region24: #{actor_forward.1} parent=1 // pred_region
      _
    $region25: #{actor_forward.1} parent=1 // pred_fallthru
      _
    // Predicated region
    $region26: #{actor_forward.1} parent=1 // pred_check
      _
    $region27: #{actor_forward.1} parent=1 // pred_check_branch
      %26 = sbr.rel (0) target = $region29
    $region28: #{actor_forward.1} parent=1 // pred_region
      _
    $region29: #{actor_forward.1} parent=1 // pred_fallthru
      _
    %v28 = vld [vmem:[%s0] sm:$0xf]
    %v29 = vld [vmem:[%s1] sm:$0xf]
    %v30 = vld [vmem:[%s1 + $0x4] sm:$0xf]
    %v31 = vld [vmem:[%s2] sm:$0x1]
    %v33 = vlaneseq
    %v34 = vshrl.u32 %v33, 7
    %v35 = vsub.s32 0, %v34
    %v36 = vrot.slane %v31, %v35
    %v40 = vunpack.c.l.b16 %v29
    %v41 = vunpack.c.l.b16 %v30
    %v42 = vpack.c.b16 %v41, %v40
    %vm44 = vcmask 130048
    %v46 = vsel %vm44, %v28, 0
    %48 = vmatprep.subr.bf16.mxu0 0
    %49 = vmatpush1.bf16.msra.mxu0 0
    %50 = vmatprep.subr.bf16.mxu0 0
    %51 = vmatpush1.bf16.msra.mxu0 0
    %52 = vmatprep.subr.bf16.mxu0 0
    %53 = vmatpush1.bf16.msra.mxu0 0
    %54 = vmatprep.subr.bf16.mxu0 0
    %55 = vmatpush1.bf16.msra.mxu0 0
    %56 = vmatprep.subr.bf16.mxu0 0
    %57 = vmatpush1.bf16.msra.mxu0 0
    %58 = vmatprep.subr.bf16.mxu0 0
    %59 = vmatpush1.bf16.msra.mxu0 0
    %60 = vmatprep.subr.bf16.mxu0 0
    %61 = vmatpush1.bf16.msra.mxu0 0
    %62 = vmatprep.subr.bf16.mxu0 0
    %63 = vmatpush1.bf16.msra.mxu0 %v42
    %64 = vmatprep.subr.bf16.mxu0 0
    %65 = vmatpush2.bf16.msra.mxu0 0
    %66 = vmatprep.subr.bf16.mxu0 0
    %67 = vmatpush2.bf16.msra.mxu0 0
    %68 = vmatprep.subr.bf16.mxu0 0
    %69 = vmatpush2.bf16.msra.mxu0 0
    %70 = vmatprep.subr.bf16.mxu0 0
    %71 = vmatpush2.bf16.msra.mxu0 0
    %72 = vmatprep.subr.bf16.mxu0 0
    %73 = vmatpush2.bf16.msra.mxu0 0
    %74 = vmatprep.subr.bf16.mxu0 0
    %75 = vmatpush2.bf16.msra.mxu0 0
    %76 = vmatprep.subr.bf16.mxu0 0
    %77 = vmatpush2.bf16.msra.mxu0 0
    %78 = vmatprep.subr.bf16.mxu0 0
    %79 = vmatpush2.bf16.msra.mxu0 0
    %80 = vmatprep.mubr.bf16.mxu0 0
    %81 = vmatmul.mubr.bf16.gmra.mxu0 %v46
    %v82 = vpop.f32.mrf.mxu0
    %v83 = vadd.f32 %v36, %v82
    %v84 = vpop.f32.mrf.mxu0
    %v85 = vpop.f32.mrf.mxu0
    %v86 = vpop.f32.mrf.mxu0
    %87 = vdwg.mxu0
    %v88 = vmax.f32 %v83, 0.0
    %v89 = vpack.c.bf16 %v88, %v88
    %v90 = vld [vmem:[%s3] sm:$0xf]
    %v91 = vld [vmem:[%s3 + $0x4] sm:$0xf]
    %v92 = vld [vmem:[%s3 + $0x8] sm:$0xf]
    %v93 = vld [vmem:[%s3 + $0xc] sm:$0xf]
    %v94 = vld [vmem:[%s4] sm:$0x1]
    %v96 = vlaneseq
    %v97 = vshrl.u32 %v96, 7
    %v98 = vsub.s32 0, %v97
    %v99 = vrot.slane %v94, %v98
    %v105 = vunpack.c.l.b16 %v90
    %v106 = vunpack.c.l.b16 %v91
    %v107 = vunpack.c.l.b16 %v92
    %v108 = vunpack.c.l.b16 %v93
    %v109 = vpack.c.b16 %v106, %v105
    %v110 = vpack.c.b16 %v108, %v107
    %vm113 = vcmask 261120
    %v115 = vsel %vm113, %v89, 0
    %117 = vmatprep.subr.bf16.mxu0 0
    %118 = vmatpush1.bf16.msra.mxu0 0
    %119 = vmatprep.subr.bf16.mxu0 0
    %120 = vmatpush1.bf16.msra.mxu0 0
    %121 = vmatprep.subr.bf16.mxu0 0
    %122 = vmatpush1.bf16.msra.mxu0 0
    %123 = vmatprep.subr.bf16.mxu0 0
    %124 = vmatpush1.bf16.msra.mxu0 0
    %125 = vmatprep.subr.bf16.mxu0 0
    %126 = vmatpush1.bf16.msra.mxu0 0
    %127 = vmatprep.subr.bf16.mxu0 0
    %128 = vmatpush1.bf16.msra.mxu0 0
    %129 = vmatprep.subr.bf16.mxu0 0
    %130 = vmatpush1.bf16.msra.mxu0 %v110
    %131 = vmatprep.subr.bf16.mxu0 0
    %132 = vmatpush1.bf16.msra.mxu0 %v109
    %133 = vmatprep.subr.bf16.mxu0 0
    %134 = vmatpush2.bf16.msra.mxu0 0
    %135 = vmatprep.subr.bf16.mxu0 0
    %136 = vmatpush2.bf16.msra.mxu0 0
    %137 = vmatprep.subr.bf16.mxu0 0
    %138 = vmatpush2.bf16.msra.mxu0 0
    %139 = vmatprep.subr.bf16.mxu0 0
    %140 = vmatpush2.bf16.msra.mxu0 0
    %141 = vmatprep.subr.bf16.mxu0 0
    %142 = vmatpush2.bf16.msra.mxu0 0
    %143 = vmatprep.subr.bf16.mxu0 0
    %144 = vmatpush2.bf16.msra.mxu0 0
    %145 = vmatprep.subr.bf16.mxu0 0
    %146 = vmatpush2.bf16.msra.mxu0 0
    %147 = vmatprep.subr.bf16.mxu0 0
    %148 = vmatpush2.bf16.msra.mxu0 0
    %149 = vmatprep.mubr.bf16.mxu0 0
    %150 = vmatmul.mubr.bf16.gmra.mxu0 %v115
    %v151 = vpop.f32.mrf.mxu0
    %v152 = vadd.f32 %v99, %v151
    %v153 = vpop.f32.mrf.mxu0
    %v154 = vpop.f32.mrf.mxu0
    %v155 = vpop.f32.mrf.mxu0
    %156 = vdwg.mxu0
    %v157 = vmax.f32 %v152, 0.0
    %v158 = vpack.c.bf16 %v157, %v157
    %v159 = vld [vmem:[%s5] sm:$0xf]
    %v160 = vld [vmem:[%s5 + $0x4] sm:$0xf]
    %v161 = vld [vmem:[%s5 + $0x8] sm:$0xf]
    %v162 = vld [vmem:[%s5 + $0xc] sm:$0xf]
    %v163 = vld [vmem:[%s6] sm:$0x1]
    %v165 = vlaneseq
    %v166 = vshrl.u32 %v165, 7
    %v167 = vsub.s32 0, %v166
    %v168 = vrot.slane %v163, %v167
    %v174 = vunpack.c.l.b16 %v159
    %v175 = vunpack.c.l.b16 %v160
    %v176 = vunpack.c.l.b16 %v161
    %v177 = vunpack.c.l.b16 %v162
    %v178 = vpack.c.b16 %v175, %v174
    %v179 = vpack.c.b16 %v177, %v176
    %v183 = vsel %vm113, %v158, 0
    %185 = vmatprep.subr.bf16.mxu0 0
    %186 = vmatpush1.bf16.msra.mxu0 0
    %187 = vmatprep.subr.bf16.mxu0 0
    %188 = vmatpush1.bf16.msra.mxu0 0
    %189 = vmatprep.subr.bf16.mxu0 0
    %190 = vmatpush1.bf16.msra.mxu0 0
    %191 = vmatprep.subr.bf16.mxu0 0
    %192 = vmatpush1.bf16.msra.mxu0 0
    %193 = vmatprep.subr.bf16.mxu0 0
    %194 = vmatpush1.bf16.msra.mxu0 0
    %195 = vmatprep.subr.bf16.mxu0 0
    %196 = vmatpush1.bf16.msra.mxu0 0
    %197 = vmatprep.subr.bf16.mxu0 0
    %198 = vmatpush1.bf16.msra.mxu0 %v179
    %199 = vmatprep.subr.bf16.mxu0 0
    %200 = vmatpush1.bf16.msra.mxu0 %v178
    %201 = vmatprep.subr.bf16.mxu0 0
    %202 = vmatpush2.bf16.msra.mxu0 0
    %203 = vmatprep.subr.bf16.mxu0 0
    %204 = vmatpush2.bf16.msra.mxu0 0
    %205 = vmatprep.subr.bf16.mxu0 0
    %206 = vmatpush2.bf16.msra.mxu0 0
    %207 = vmatprep.subr.bf16.mxu0 0
    %208 = vmatpush2.bf16.msra.mxu0 0
    %209 = vmatprep.subr.bf16.mxu0 0
    %210 = vmatpush2.bf16.msra.mxu0 0
    %211 = vmatprep.subr.bf16.mxu0 0
    %212 = vmatpush2.bf16.msra.mxu0 0
    %213 = vmatprep.subr.bf16.mxu0 0
    %214 = vmatpush2.bf16.msra.mxu0 0
    %215 = vmatprep.subr.bf16.mxu0 0
    %216 = vmatpush2.bf16.msra.mxu0 0
    %217 = vmatprep.mubr.bf16.mxu0 0
    %218 = vmatmul.mubr.bf16.gmra.mxu0 %v183
    %v219 = vpop.f32.mrf.mxu0
    %v220 = vadd.f32 %v168, %v219
    %v221 = vpop.f32.mrf.mxu0
    %v222 = vpop.f32.mrf.mxu0
    %v223 = vpop.f32.mrf.mxu0
    %224 = vdwg.mxu0
    %v225 = vtanh.pop %v220
    %226 = vst [vmem:[#allocation2] sm:$0xff] %v225
    // Predicated region
    $region30: #{actor_forward.1} parent=1 // pred_check
      _
    $region31: #{actor_forward.1} parent=1 // pred_check_branch
      %228 = sbr.rel (0) target = $region33
    $region32: #{actor_forward.1} parent=1 // pred_region
      %s230 = ssub.s32 128, 128
      %231 = vsyncadd [#allocation3], %s230
      %s233 = sshll.u32 [#allocation2], 4
      %s234 = int_to_ptr.vmem [resolvable:$true] %s233
      %236 = dma.vmem_to_hbm [thread:$0]  %s234, 128, %s7, [#allocation3]
    $region33: #{actor_forward.1} parent=1 // pred_fallthru
      _
    // Predicated region
    $region34: #{actor_forward.1} parent=1 // pred_check
      _
    $region35: #{actor_forward.1} parent=1 // pred_check_branch
      %238 = sbr.rel (0) target = $region37
    $region36: #{actor_forward.1} parent=1 // pred_region
      %239 = dma.done [#allocation3], 128
    $region37: #{actor_forward.1} parent=1 // pred_fallthru
      _
    %240 = vsyncpa [#allocation3], 1

</llo_original>
